<compile_context>
chip_gen: v5e
topology: v5e:2x2
jax: 0.10.0
libtpu: 0.0.40
codegen_flags: <defaults>
</compile_context>

<pallas_src>
import functools

import jax
import jax.numpy as jnp
from jax.experimental import pallas as pl
from jax.experimental.pallas import tpu as pltpu


def _round_up(v: int, m: int) -> int:
    return ((v + m - 1) // m) * m


# --------------------------------------------------------------------------- #
# Kernels
# --------------------------------------------------------------------------- #
def _chebykan_fused_kernel(x_ref, w_ref, o_ref, basis_ref, *,
                           degree: int, in_features: int):
    """Fused-K path (small In): build a bf16 basis scratch once per row tile,
    then a single MXU matmul with K = (degree+1)*In per Out tile."""
    # (Re)build the basis only when entering a new row tile (Out-tile index 0);
    # the scratch persists across grid steps and is reused for every Out tile.
    @pl.when(pl.program_id(1) == 0)
    def _():
        t = jnp.tanh(x_ref[...].astype(jnp.float32))            # T_1 in (-1, 1)
        basis_ref[:, 0:in_features] = jnp.ones_like(t).astype(jnp.bfloat16)
        if degree >= 1:
            basis_ref[:, in_features:2 * in_features] = t.astype(jnp.bfloat16)
        t_prev, t_cur = jnp.ones_like(t), t
        for d in range(2, degree + 1):
            t_prev, t_cur = t_cur, 2.0 * t * t_cur - t_prev     # T_d recurrence
            basis_ref[:, d * in_features:(d + 1) * in_features] = (
                t_cur.astype(jnp.bfloat16))

    acc = jnp.dot(basis_ref[...], w_ref[...],
                  preferred_element_type=jnp.float32)
    o_ref[...] = acc.astype(o_ref.dtype)


def _chebykan_perdeg_kernel(x_ref, w_ref, o_ref, *,
                            degree: int, in_features: int):
    """Per-degree path (large In): accumulate T_d @ W_d inside the recurrence;
    no (row_tile, K) basis operand is ever materialized."""
    t = jnp.tanh(x_ref[...].astype(jnp.float32))
    t_prev = jnp.ones_like(t)                                   # T_0
    acc = jnp.dot(t_prev.astype(jnp.bfloat16),
                  w_ref[0:in_features, :],
                  preferred_element_type=jnp.float32)
    if degree >= 1:
        t_cur = t
        acc = acc + jnp.dot(t_cur.astype(jnp.bfloat16),
                            w_ref[in_features:2 * in_features, :],
                            preferred_element_type=jnp.float32)
        for d in range(2, degree + 1):
            t_prev, t_cur = t_cur, 2.0 * t * t_cur - t_prev
            acc = acc + jnp.dot(t_cur.astype(jnp.bfloat16),
                                w_ref[d * in_features:(d + 1) * in_features, :],
                                preferred_element_type=jnp.float32)
    o_ref[...] = acc.astype(o_ref.dtype)


# --------------------------------------------------------------------------- #
# Wrapper
# --------------------------------------------------------------------------- #
def _tpu_vmem_capacity_bytes() -> int:
    try:
        cap = getattr(pltpu.get_tpu_info(), "vmem_capacity_bytes", None)
        if cap:
            return int(cap)
    except Exception:
        pass
    return 64 * 1024 * 1024        # conservative default (v7x per-core VMEM)


def kan_chebyshev_forward(x, cheby_coeffs, *, row_tile=None):
    """x: (B, S, in_features); cheby_coeffs: (in_features, out_features, degree+1)."""
    B, S, In = x.shape
    In2, Out, Dp1 = cheby_coeffs.shape
    assert In == In2
    degree = Dp1 - 1
    N = B * S
    K = Dp1 * In

    x_itemsize = jnp.dtype(x.dtype).itemsize
    out_dtype = x.dtype
    out_itemsize = jnp.dtype(out_dtype).itemsize

    # -------- Generation-gated VMEM budget / default row tile. -------- #
    vmem_cap = _tpu_vmem_capacity_bytes()
    if vmem_cap >= 100 * 1024 * 1024:           # v5e / v6e: 128 MiB VMEM
        vmem_limit = 96 * 1024 * 1024
        vmem_budget = 72 * 1024 * 1024
        default_row_tile = 1024
    else:                                       # v7x: 64 MiB physical VMEM
        vmem_limit = 32 * 1024 * 1024
        vmem_budget = 24 * 1024 * 1024
        default_row_tile = 512
    if row_tile is None:
        row_tile = default_row_tile

    # -------- Out tiling. -------- #
    # Small Out: store the exact width (masked vst beats 4x HBM writeback in a
    # memory-bound regime).  Large Out: lane-dense multiple-of-128 tiles so the
    # coefficient matrix never has to fit VMEM all at once.
    if Out <= 128:
        tile_out = Out
        OutPad = Out
    else:
        # Coeff tile (bf16, double-buffered) capped at ~40% of the budget.
        cap_cols = (vmem_budget * 2 // 5) // (2 * K * 2)
        cap_cols = max(128, (cap_cols // 128) * 128)
        tile_out = min(_round_up(Out, 128), cap_cols, 2048)
        OutPad = _round_up(Out, tile_out)

    # Fused-K path for small In (per-degree K would starve the MXU reduction
    # depth); per-degree accumulation for large In (no (tile, K) buffer).
    use_fused = In < 256

    # -------- Row tile. -------- #
    # Multiple of 16 (bf16 sublane pack), clamped to the token count and the
    # VMEM budget.  Ensure >= 2 row-grid steps when there is enough work so
    # both v7x TensorCores (sharding the "parallel" axis) are used.
    tile = max(16, min(row_tile, _round_up(N, 16)))
    tile = _round_up(tile, 16)
    if N >= 256 and pl.cdiv(N, tile) < 2:
        tile = max(128, _round_up(pl.cdiv(N, 2), 16))

    def _vmem_estimate(t: int) -> int:
        est = (2 * t * In * x_itemsize             # x tile (double-buffered)
               + 2 * t * tile_out * out_itemsize   # out tile (double-buffered)
               + 2 * K * tile_out * 2              # coeff tile bf16 (double-buffered)
               + 3 * t * In * 4                    # live f32 recurrence temps
               + t * tile_out * 4)                 # f32 matmul accumulator
        if use_fused:
            est += t * K * 2                       # bf16 basis scratch (single)
        return est

    while tile > 16 and _vmem_estimate(tile) > vmem_budget:
        tile = max(16, _round_up(tile // 2, 16))

    # Pad the token axis to a tile multiple (padded rows sliced off below).
    NPad = _round_up(N, tile)
    x_flat = x.reshape(N, In)
    if NPad != N:
        x_flat = jnp.pad(x_flat, ((0, NPad - N), (0, 0)))

    # Weight prep: (in, out, d) -> (d, in, out) -> (K, OutPad), bf16 for MXU.
    # NOTE: pure function of the static params; cache it for repeated calls.
    w = jnp.transpose(cheby_coeffs, (2, 0, 1)).reshape(K, Out)
    if OutPad != Out:
        w = jnp.pad(w, ((0, 0), (0, OutPad - Out)))
    w = w.astype(jnp.bfloat16)

    grid = (NPad // tile, OutPad // tile_out)

    if use_fused:
        kernel = functools.partial(_chebykan_fused_kernel,
                                   degree=degree, in_features=In)
        scratch_shapes = [pltpu.VMEM((tile, K), jnp.bfloat16)]
    else:
        kernel = functools.partial(_chebykan_perdeg_kernel,
                                   degree=degree, in_features=In)
        scratch_shapes = []

    cost = pl.CostEstimate(
        flops=2 * NPad * K * OutPad,
        transcendentals=NPad * In,
        bytes_accessed=(NPad * In * x_itemsize
                        + K * OutPad * 2
                        + NPad * OutPad * out_itemsize),
    )

    out_padded = pl.pallas_call(
        kernel,
        out_shape=jax.ShapeDtypeStruct((NPad, OutPad), out_dtype),
        grid_spec=pltpu.PrefetchScalarGridSpec(
            num_scalar_prefetch=0,
            grid=grid,
            in_specs=[
                # Same x block index across the Out axis -> fetched once / row tile.
                pl.BlockSpec((tile, In), lambda i, j: (i, 0)),
                pl.BlockSpec((K, tile_out), lambda i, j: (0, j)),
            ],
            out_specs=pl.BlockSpec((tile, tile_out), lambda i, j: (i, j)),
            scratch_shapes=scratch_shapes,
        ),
        compiler_params=pltpu.CompilerParams(
            # Out axis is "arbitrary": the fused kernel reuses the basis
            # scratch across it (fill gated on program_id(1) == 0).
            dimension_semantics=("parallel", "arbitrary"),
            vmem_limit_bytes=vmem_limit,
        ),
        cost_estimate=cost,
    )(x_flat, w)

    # Strip the token / lane padding and restore (B, S, Out).
    return out_padded[:N, :Out].reshape(B, S, Out)


# --------------------------------------------------------------------------- #
# Pure-JAX reference (mirrors the PyTorch ChebyKANLayer acos/cos form)
# --------------------------------------------------------------------------- #
def _reference(x, coeffs_iod):
    B, S, In = x.shape
    degree = coeffs_iod.shape[-1] - 1
    xf = jnp.tanh(x.reshape(-1, In).astype(jnp.float32))
    theta = jnp.arccos(xf)[:, :, None]                      # (N, in, 1)
    d = jnp.arange(degree + 1, dtype=jnp.float32)           # (degree+1,)
    basis = jnp.cos(theta * d)                              # (N, in, degree+1)
    y = jnp.einsum("bid,iod->bo", basis, coeffs_iod.astype(jnp.float32))
    return y.reshape(B, S, -1)


if __name__ == "__main__":
    # Small shapes consistent with the module's forward: (batch, seq, in_features)
    B, S = 2, 8
    in_features, out_features, degree = 32, 32, 3

    key = jax.random.PRNGKey(0)
    kx, kw = jax.random.split(key)

    x = jax.random.normal(kx, (B, S, in_features), dtype=jnp.float32)

    # Deterministic parameters matching the PyTorch module:
    # cheby_coeffs ~ Normal(0, 1/(in_features*(degree+1))), shape (in, out, degree+1)
    std = 1.0 / (in_features * (degree + 1))
    coeffs_iod = std * jax.random.normal(
        kw, (in_features, out_features, degree + 1), dtype=jnp.float32
    )

    y = kan_chebyshev_forward(x, coeffs_iod)
    y = jax.block_until_ready(y)

    y_ref = _reference(x, coeffs_iod)
    assert y.shape == (B, S, out_features)
    # bf16 MXU operands with f32 accumulation -> relaxed tolerance vs f32 reference.
    assert jnp.allclose(y, y_ref, atol=2e-3, rtol=2e-2), "mismatch vs reference"

    print("KERNEL_OK")
</pallas_src>

<mosaic_0001>
module attributes {stable_mosaic.version = 11 : i64} {
  func.func @_chebykan_fused_kernel(%arg0: i32, %arg1: i32, %arg2: memref<16x32xf32, #tpu.memory_space<vmem>>, %arg3: memref<128x32xbf16, #tpu.memory_space<vmem>>, %arg4: memref<16x32xf32, #tpu.memory_space<vmem>>, %arg5: memref<16x128xbf16, #tpu.memory_space<vmem>>) attributes {dimension_semantics = [#tpu.dimension_semantics<parallel>, #tpu.dimension_semantics<arbitrary>], iteration_bounds = array<i64: 1, 1>, scalar_prefetch = 0 : i64, scratch_operands = 1 : i64, tpu.core_type = #tpu.core_type<tc>, window_params = [{transform_indices = @transform_0, window_bounds = array<i64: 16, 32>}, {transform_indices = @transform_1, window_bounds = array<i64: 128, 32>}, {transform_indices = @transform_2, window_bounds = array<i64: 16, 32>}]} {
    %c0_i32 = arith.constant 0 : i32
    %0 = arith.cmpi eq, %arg1, %c0_i32 : i32
    %1 = arith.extui %0 : i1 to i32
    %c0_i32_0 = arith.constant 0 : i32
    %2 = arith.cmpi ne, %1, %c0_i32_0 : i32
    scf.if %2 {
      %c0_6 = arith.constant 0 : index
      %c0_7 = arith.constant 0 : index
      %7 = vector.load %arg2[%c0_6, %c0_7] : memref<16x32xf32, #tpu.memory_space<vmem>>, vector<16x32xf32>
      %8 = math.tanh %7 : vector<16x32xf32>
      %cst_8 = arith.constant 1.000000e+00 : f32
      %9 = vector.broadcast %cst_8 : f32 to vector<16x32xf32>
      %10 = arith.truncf %9 : vector<16x32xf32> to vector<16x32xbf16>
      %c0_9 = arith.constant 0 : index
      %c0_10 = arith.constant 0 : index
      %11 = vector.load %arg5[%c0_9, %c0_10] : memref<16x128xbf16, #tpu.memory_space<vmem>>, vector<16x32xbf16>
      tpu.vector_store %arg5[%c0_9, %c0_10], %10 {strides = array<i32>} : memref<16x128xbf16, #tpu.memory_space<vmem>>, vector<16x32xbf16>,
      %12 = arith.truncf %8 : vector<16x32xf32> to vector<16x32xbf16>
      %c0_11 = arith.constant 0 : index
      %c32 = arith.constant 32 : index
      %13 = vector.load %arg5[%c0_11, %c32] : memref<16x128xbf16, #tpu.memory_space<vmem>>, vector<16x32xbf16>
      tpu.vector_store %arg5[%c0_11, %c32], %12 {strides = array<i32>} : memref<16x128xbf16, #tpu.memory_space<vmem>>, vector<16x32xbf16>,
      %cst_12 = arith.constant 1.000000e+00 : f32
      %14 = vector.broadcast %cst_12 : f32 to vector<16x32xf32>
      %cst_13 = arith.constant 2.000000e+00 : f32
      %15 = vector.broadcast %cst_13 : f32 to vector<16x32xf32>
      %16 = arith.mulf %15, %8 : vector<16x32xf32>
      %17 = arith.mulf %16, %8 : vector<16x32xf32>
      %18 = arith.subf %17, %14 : vector<16x32xf32>
      %19 = arith.truncf %18 : vector<16x32xf32> to vector<16x32xbf16>
      %c0_14 = arith.constant 0 : index
      %c64 = arith.constant 64 : index
      %20 = vector.load %arg5[%c0_14, %c64] : memref<16x128xbf16, #tpu.memory_space<vmem>>, vector<16x32xbf16>
      tpu.vector_store %arg5[%c0_14, %c64], %19 {strides = array<i32>} : memref<16x128xbf16, #tpu.memory_space<vmem>>, vector<16x32xbf16>,
      %cst_15 = arith.constant 2.000000e+00 : f32
      %21 = vector.broadcast %cst_15 : f32 to vector<16x32xf32>
      %22 = arith.mulf %21, %8 : vector<16x32xf32>
      %23 = arith.mulf %22, %18 : vector<16x32xf32>
      %24 = arith.subf %23, %8 : vector<16x32xf32>
      %25 = arith.truncf %24 : vector<16x32xf32> to vector<16x32xbf16>
      %c0_16 = arith.constant 0 : index
      %c96 = arith.constant 96 : index
      %26 = vector.load %arg5[%c0_16, %c96] : memref<16x128xbf16, #tpu.memory_space<vmem>>, vector<16x32xbf16>
      tpu.vector_store %arg5[%c0_16, %c96], %25 {strides = array<i32>} : memref<16x128xbf16, #tpu.memory_space<vmem>>, vector<16x32xbf16>,
    } else {
    }
    %c0 = arith.constant 0 : index
    %c0_1 = arith.constant 0 : index
    %3 = vector.load %arg5[%c0, %c0_1] : memref<16x128xbf16, #tpu.memory_space<vmem>>, vector<16x128xbf16>
    %c0_2 = arith.constant 0 : index
    %c0_3 = arith.constant 0 : index
    %4 = vector.load %arg3[%c0_2, %c0_3] : memref<128x32xbf16, #tpu.memory_space<vmem>>, vector<128x32xbf16>
    %cst = arith.constant dense<0.000000e+00> : vector<16x32xf32>
    %5 = tpu.matmul %3, %4, %cst {dimension_numbers = #tpu.dot_dimension_numbers<[1], [0], [0], [1], [0, 0, 1, 1], [], []>} : vector<16x128xbf16>, vector<128x32xbf16>, vector<16x32xf32> -> vector<16x32xf32>
    %c0_4 = arith.constant 0 : index
    %c0_5 = arith.constant 0 : index
    %6 = vector.load %arg4[%c0_4, %c0_5] : memref<16x32xf32, #tpu.memory_space<vmem>>, vector<16x32xf32>
    tpu.vector_store %arg4[%c0_4, %c0_5], %5 {strides = array<i32>} : memref<16x32xf32, #tpu.memory_space<vmem>>, vector<16x32xf32>,
    return
  }
  func.func @transform_0(%arg0: i32, %arg1: i32) -> (i32, i32) {
    %c0_i32 = arith.constant 0 : i32
    %c0_i32_0 = arith.constant 0 : i32
    return %arg0, %c0_i32 : i32, i32
  }
  func.func @transform_1(%arg0: i32, %arg1: i32) -> (i32, i32) {
    %c0_i32 = arith.constant 0 : i32
    %c0_i32_0 = arith.constant 0 : i32
    return %c0_i32, %arg1 : i32, i32
  }
  func.func @transform_2(%arg0: i32, %arg1: i32) -> (i32, i32) {
    %c0_i32 = arith.constant 0 : i32
    return %arg0, %arg1 : i32, i32
  }
}

</mosaic_0001>

<llo_original>
// kernel: tpu_custom_call.1
$region0: #{tpu_custom_call.1}
  #allocation0 [shape = 'u32[]', space=smem, size = 0x4, offset = 0x4, fixed_abs, tag = 'smem constant byte address 0x4 - core index']
  #allocation1 [shape = 'u32[72,128]{1,0:T(1,128)}', space=vmem, size = 0x9000, scoped, tag = 'internal scratch']
  #allocation2 [shape = 'bf16[16,128]{1,0:T(8,128)(2,1)}', space=vmem, size = 0x1000, scoped, tag = 'scratch operand']
  %s0 = inlined_call_operand.vmem [shape: f32[16,32], index: 0, kind: input, shape index: {}]
  %s1 = inlined_call_operand.vmem [shape: bf16[128,32], index: 1, kind: input, shape index: {}]
  %s2 = inlined_call_operand.hbm [shape: f32[16,32], index: 2, kind: output, shape index: {}]
  %s3 = sld [smem:[#allocation0]]
  $region22: #{tpu_custom_call.1} parent=0
    _
  %s5 = ssub.s32 1, %s3
  %s6 = scalar_select 0, %s5, %s3
  $region1: #{tpu_custom_call.1} parent=0
    #allocation3 [shape = 'u8[8192]{0}', space=vmem, size = 0x2000, scoped, tag = 'output window, operand 0, single buffered']
    #allocation4 [shape = 's32[1]{0}', space=sflag, size = 0x4, scoped, tag = 'scoped memory for tpu_custom_call.1']
    %7 = vsyncpa [#allocation4], 0
    // Predicated region
    $region2: #{tpu_custom_call.1} parent=1 // pred_check
      _
    $region3: #{tpu_custom_call.1} parent=1 // pred_check_branch
      %9 = sbr.rel (0) target = $region5
    $region4: #{tpu_custom_call.1} parent=1 // pred_region
      _
    $region5: #{tpu_custom_call.1} parent=1 // pred_fallthru
      _
    // Predicated region
    $region6: #{tpu_custom_call.1} parent=1 // pred_check
      _
    $region7: #{tpu_custom_call.1} parent=1 // pred_check_branch
      %11 = sbr.rel (0) target = $region9
    $region8: #{tpu_custom_call.1} parent=1 // pred_region
      _
    $region9: #{tpu_custom_call.1} parent=1 // pred_fallthru
      _
    %p13 = scmp.eq.s32.totalorder 0, 0
    // Predicated region
    $region10: #{tpu_custom_call.1} parent=1 // pred_check
      %p14 = pneg %p13
    $region11: #{tpu_custom_call.1} parent=1 // pred_check_branch
      %16 = sbr.rel (%p14) target = $region13
    $region12: #{tpu_custom_call.1} parent=1 // pred_region
      %v17 = vld [vmem:[%s0] sm:$0xff]
      %v18 = vld [vmem:[%s0 + $0x8] sm:$0xff]
      %v19 = vtanh.pop %v17
      %v20 = vtanh.pop %v18
      %vm21 = vcmask 257024
      %22 = vst.msk [vmem:[#allocation2] sm:$0xf] %vm21, 1065369472
      %23 = vst.msk [vmem:[#allocation2 + $0x4] sm:$0xf] %vm21, 1065369472
      %v24 = vpack.c.bf16 %v19, %v19
      %v25 = vpack.c.bf16 %v20, %v20
      %28 = vrot.lane.b32.xlu0 %v24, 32
      %v29 = vpop.permute.xlu0 %28
      %30 = vrot.lane.b32.xlu0 %v25, 32
      %v31 = vpop.permute.xlu0 %30
      %vm34 = vcmask 519424
      %35 = vst.msk [vmem:[#allocation2] sm:$0xf] %vm34, %v29
      %36 = vst.msk [vmem:[#allocation2 + $0x4] sm:$0xf] %vm34, %v31
      %v37 = vmul.f32 %v19, 2.0
      %v38 = vmul.f32 %v20, 2.0
      %v39 = vmul.f32 %v37, %v19
      %v40 = vmul.f32 %v38, %v20
      %v41 = vsub.f32 %v39, 1.0
      %v42 = vsub.f32 %v40, 1.0
      %v43 = vpack.c.bf16 %v41, %v41
      %v44 = vpack.c.bf16 %v42, %v42
      %47 = vrot.lane.b32.xlu0 %v43, 64
      %v48 = vpop.permute.xlu0 %47
      %49 = vrot.lane.b32.xlu0 %v44, 64
      %v50 = vpop.permute.xlu0 %49
      %vm53 = vcmask 781824
      %54 = vst.msk [vmem:[#allocation2] sm:$0xf] %vm53, %v48
      %55 = vst.msk [vmem:[#allocation2 + $0x4] sm:$0xf] %vm53, %v50
      %v56 = vmul.f32 %v37, %v41
      %v57 = vmul.f32 %v38, %v42
      %v58 = vsub.f32 %v56, %v19
      %v59 = vsub.f32 %v57, %v20
      %v60 = vpack.c.bf16 %v58, %v58
      %v61 = vpack.c.bf16 %v59, %v59
      %64 = vrot.lane.b32.xlu0 %v60, 96
      %v65 = vpop.permute.xlu0 %64
      %66 = vrot.lane.b32.xlu0 %v61, 96
      %v67 = vpop.permute.xlu0 %66
      %vm70 = vcmask 1044224
      %71 = vst.msk [vmem:[#allocation2] sm:$0xf] %vm70, %v65
      %72 = vst.msk [vmem:[#allocation2 + $0x4] sm:$0xf] %vm70, %v67
    $region13: #{tpu_custom_call.1} parent=1 // pred_fallthru
      _
    %v73 = vld [vmem:[#allocation2] sm:$0xf]
    %v74 = vld [vmem:[#allocation2 + $0x4] sm:$0xf]
    %v75 = vld [vmem:[%s1] sm:$0xf]
    %v76 = vld [vmem:[%s1 + $0x4] sm:$0xf]
    %v77 = vld [vmem:[%s1 + $0x8] sm:$0xf]
    %v78 = vld [vmem:[%s1 + $0xc] sm:$0xf]
    %v79 = vld [vmem:[%s1 + $0x10] sm:$0xf]
    %v80 = vld [vmem:[%s1 + $0x14] sm:$0xf]
    %v81 = vld [vmem:[%s1 + $0x18] sm:$0xf]
    %v82 = vld [vmem:[%s1 + $0x1c] sm:$0xf]
    %v83 = vld [vmem:[%s1 + $0x20] sm:$0xf]
    %v84 = vld [vmem:[%s1 + $0x24] sm:$0xf]
    %v85 = vld [vmem:[%s1 + $0x28] sm:$0xf]
    %v86 = vld [vmem:[%s1 + $0x2c] sm:$0xf]
    %v87 = vld [vmem:[%s1 + $0x30] sm:$0xf]
    %v88 = vld [vmem:[%s1 + $0x34] sm:$0xf]
    %v89 = vld [vmem:[%s1 + $0x38] sm:$0xf]
    %v90 = vld [vmem:[%s1 + $0x3c] sm:$0xf]
    %v93 = vunpack.c.l.b16 %v73
    %v94 = vunpack.c.l.b16 %v74
    %v95 = vpack.c.b16 %v94, %v93
    %v113 = vunpack.c.l.b16 %v75
    %v114 = vunpack.c.l.b16 %v76
    %v115 = vunpack.c.l.b16 %v77
    %v116 = vunpack.c.l.b16 %v78
    %v117 = vunpack.c.l.b16 %v79
    %v118 = vunpack.c.l.b16 %v80
    %v119 = vunpack.c.l.b16 %v81
    %v120 = vunpack.c.l.b16 %v82
    %v121 = vunpack.c.l.b16 %v83
    %v122 = vunpack.c.l.b16 %v84
    %v123 = vunpack.c.l.b16 %v85
    %v124 = vunpack.c.l.b16 %v86
    %v125 = vunpack.c.l.b16 %v87
    %v126 = vunpack.c.l.b16 %v88
    %v127 = vunpack.c.l.b16 %v89
    %v128 = vunpack.c.l.b16 %v90
    %v129 = vpack.c.b16 %v114, %v113
    %v130 = vpack.c.b16 %v116, %v115
    %v131 = vpack.c.b16 %v118, %v117
    %v132 = vpack.c.b16 %v120, %v119
    %v133 = vpack.c.b16 %v122, %v121
    %v134 = vpack.c.b16 %v124, %v123
    %v135 = vpack.c.b16 %v126, %v125
    %v136 = vpack.c.b16 %v128, %v127
    %145 = vmatpush.bf16.msra.mxu0 %v136
    %146 = vmatpush.bf16.msra.mxu0 %v135
    %147 = vmatpush.bf16.msra.mxu0 %v134
    %148 = vmatpush.bf16.msra.mxu0 %v133
    %149 = vmatpush.bf16.msra.mxu0 %v132
    %150 = vmatpush.bf16.msra.mxu0 %v131
    %151 = vmatpush.bf16.msra.mxu0 %v130
    %152 = vmatpush.bf16.msra.mxu0 %v129
    %153 = vmatmul.bf16.gmra.mxu0 %v95
    %v154 = vpop.f32.mrf.mxu0
    %v155 = vadd.f32 0.0, %v154
    %v156 = vpop.f32.mrf.mxu0
    %v157 = vadd.f32 0.0, %v156
    %158 = vdwg.mxu0
    %vm159 = vcmask 261120
    %160 = vst.msk [vmem:[#allocation3] sm:$0xff] %vm159, %v155
    %161 = vst.msk [vmem:[#allocation3 + $0x8] sm:$0xff] %vm159, %v157
    // Predicated region
    $region14: #{tpu_custom_call.1} parent=1 // pred_check
      _
    $region15: #{tpu_custom_call.1} parent=1 // pred_check_branch
      %163 = sbr.rel (0) target = $region17
    $region16: #{tpu_custom_call.1} parent=1 // pred_region
      %165 = vsyncadd [#allocation4], 0
      %s166 = sshll.u32 [#allocation3], 4
      %s167 = int_to_ptr.vmem [resolvable:$true] %s166
      %s168 = sshll.u32 %s2, 4
      %s169 = int_to_ptr.hbm [resolvable:$true] %s168
      %174 = dma.vmem_to_hbm [thread:$0]  %s167, 256, %s169, [#allocation4], 128, 128, 8
    $region17: #{tpu_custom_call.1} parent=1 // pred_fallthru
      _
    // Predicated region
    $region18: #{tpu_custom_call.1} parent=1 // pred_check
      _
    $region19: #{tpu_custom_call.1} parent=1 // pred_check_branch
      %176 = sbr.rel (0) target = $region21
    $region20: #{tpu_custom_call.1} parent=1 // pred_region
      %178 = dma.done [#allocation4], 256
    $region21: #{tpu_custom_call.1} parent=1 // pred_fallthru
      _
    %179 = vsyncpa [#allocation4], 1

</llo_original>
